<compile_context>
chip_gen: v5e
topology: v5e:2x2
jax: 0.10.0
libtpu: 0.0.40
codegen_flags: <defaults>
</compile_context>

<pallas_src>
import functools

import jax
import jax.numpy as jnp
from jax.experimental import pallas as pl
from jax.experimental.pallas import tpu as pltpu


def _round_up(x, m):
    return ((x + m - 1) // m) * m


def _ffn_kernel(x_ref, w1_ref, b1_ref, w2_ref, b2_ref, o_ref, *, approximate_gelu):
    # x_ref : (tm, d_model)   f32 row tile of tokens (cast to bf16 in-kernel)
    # w1_ref: (d_model, tff)  bf16 chunk of W1 columns (resident when nk == 1)
    # b1_ref: (1, tff)        f32
    # w2_ref: (tff, d_model)  bf16 chunk of W2 rows   (resident when nk == 1)
    # b2_ref: (1, d_model)    f32
    # o_ref : (tm, d_model)   f32 output tile, VMEM-resident across the k axis
    k = pl.program_id(1)

    @pl.when(k == 0)
    def _():
        o_ref[...] = jnp.zeros_like(o_ref)

    # first linear (bf16 operands, f32 accumulation on the MXU) + bias
    xb = x_ref[...].astype(jnp.bfloat16)
    h = jnp.dot(xb, w1_ref[...], preferred_element_type=jnp.float32)
    h = h + b1_ref[...]
    # GELU: tanh approximation by default (rides the EUP slot; exact erf would make
    # the VALU the critical unit on v6e/v7x). Elementwise over d_ff, so per-chunk
    # application is exact w.r.t. the d_ff reduction.
    h = jax.nn.gelu(h, approximate=approximate_gelu)
    # TODO(synk): dropout omitted (inference semantics; p=0.1 only active in training)

    # second linear: accumulate partial sums over the d_ff chunks directly into o_ref
    o_ref[...] += jnp.dot(h.astype(jnp.bfloat16), w2_ref[...],
                          preferred_element_type=jnp.float32)

    @pl.when(k == pl.num_programs(1) - 1)
    def _():
        o_ref[...] += b2_ref[...]


def position_wise_feed_forward(x, w1, b1, w2, b2, *, tm=512, tff=None,
                               approximate_gelu=True):
    """x: (B, S, d_model) float32. w1: (d_model, d_ff), w2: (d_ff, d_model).
    Returns (B, S, d_model) float32."""
    B, S, d_model = x.shape
    d_ff = w1.shape[1]
    M = B * S

    # ---- row tile: multiple of 16, capped so there are >= 2 row tiles when
    # possible (megacore balance on v7x), and never larger than the row count.
    two_tile_cap = _round_up(max(1, -(-M // 2)), 16)
    tm = max(16, min(_round_up(tm, 16), two_tile_cap))

    # ---- d_ff chunk: prefer resident weights (tff = d_ff) under a VMEM budget
    # that is conservative for v7x's 64 MiB/TC (assumes 2x buffering everywhere).
    VMEM_BUDGET = 48 * 1024 * 1024

    def vmem_need(tm_, tff_):
        w = 2 * d_model * tff_ * 2 * 2       # W1 + W2 chunks, bf16, double-buffered
        xo = 2 * tm_ * d_model * 4 * 2       # x + out tiles, f32, double-buffered
        b = (tff_ + d_model) * 4 * 2         # biases
        return w + xo + b

    valid_tff = (tff is not None and d_ff % tff == 0
                 and (tff % 128 == 0 or tff == d_ff))
    if not valid_tff:
        cands = sorted({c for c in range(128, d_ff + 1, 128) if d_ff % c == 0}
                       | {d_ff}, reverse=True)
        tff = next((c for c in cands if vmem_need(tm, c) <= VMEM_BUDGET), cands[-1])
        while vmem_need(tm, tff) > VMEM_BUDGET and tm > 16:
            tm = max(16, _round_up(tm // 2, 16))
    nk = d_ff // tff

    M_pad = _round_up(M, tm)
    num_row_tiles = M_pad // tm

    # ---- operands: x stays f32 (cast to bf16 inside the kernel); weights bf16.
    x2d = x.reshape(M, d_model).astype(jnp.float32)
    if M_pad != M:
        x2d = jnp.pad(x2d, ((0, M_pad - M), (0, 0)))
    w1b = w1.astype(jnp.bfloat16)
    w2b = w2.astype(jnp.bfloat16)
    b1_2d = b1.reshape(1, d_ff).astype(jnp.float32)
    b2_2d = b2.reshape(1, d_model).astype(jnp.float32)

    # ---- VMEM limit: above the scoped defaults, with headroom; safe on 64 MiB v7x.
    need = vmem_need(tm, tff)
    vmem_limit_bytes = int(max(32 << 20, min(56 << 20, need + (8 << 20))))
    vmem_limit_bytes = max(vmem_limit_bytes, int(need + (4 << 20)))

    # ---- cost estimate reflecting the actual schedule.
    flops = 2 * 2 * M_pad * d_model * d_ff
    w_bytes = 2 * d_model * d_ff * 2                       # bf16 W1 + W2
    w_stream = w_bytes * (num_row_tiles if nk > 1 else 1)  # resident => fetched once
    bytes_accessed = (M_pad * d_model * 4                  # x read (f32)
                      + M_pad * d_model * 4                # out write (f32)
                      + w_stream
                      + (d_ff + d_model) * 4)

    out2d = pl.pallas_call(
        functools.partial(_ffn_kernel, approximate_gelu=approximate_gelu),
        out_shape=jax.ShapeDtypeStruct((M_pad, d_model), jnp.float32),
        grid_spec=pltpu.PrefetchScalarGridSpec(
            num_scalar_prefetch=0,
            grid=(num_row_tiles, nk),
            in_specs=[
                pl.BlockSpec((tm, d_model), lambda i, k: (i, 0)),   # x row tile
                pl.BlockSpec((d_model, tff), lambda i, k: (0, k)),  # W1 chunk
                pl.BlockSpec((1, tff), lambda i, k: (0, k)),        # b1 chunk
                pl.BlockSpec((tff, d_model), lambda i, k: (k, 0)),  # W2 chunk
                pl.BlockSpec((1, d_model), lambda i, k: (0, 0)),    # b2
            ],
            out_specs=pl.BlockSpec((tm, d_model), lambda i, k: (i, 0)),
        ),
        compiler_params=pltpu.CompilerParams(
            dimension_semantics=("parallel", "arbitrary"),
            vmem_limit_bytes=vmem_limit_bytes),
        cost_estimate=pl.CostEstimate(
            flops=flops,
            transcendentals=M_pad * d_ff,
            bytes_accessed=bytes_accessed),
    )(x2d, w1b, b1_2d, w2b, b2_2d)

    return out2d[:M].reshape(B, S, d_model)


if __name__ == "__main__":
    # Small shapes consistent with the module forward (real ViT/Transformer would be
    # d_model=512/768, d_ff=2048/3072 where the resident-weight path also engages).
    # S=9 exercises row padding + multiple row tiles; d_ff=256 lets us also test the
    # chunked (nk=2) reduction path.
    B, S, d_model, d_ff = 2, 9, 32, 256

    key = jax.random.PRNGKey(0)
    kx, kw1, kb1, kw2, kb2 = jax.random.split(key, 5)

    x = jax.random.normal(kx, (B, S, d_model), dtype=jnp.float32)
    w1 = jax.random.normal(kw1, (d_model, d_ff), dtype=jnp.float32) * (1.0 / d_model ** 0.5)
    b1 = jax.random.normal(kb1, (d_ff,), dtype=jnp.float32) * 0.01
    w2 = jax.random.normal(kw2, (d_ff, d_model), dtype=jnp.float32) * (1.0 / d_ff ** 0.5)
    b2 = jax.random.normal(kb2, (d_model,), dtype=jnp.float32) * 0.01

    # Path 1: auto schedule (weights resident, nk = 1, row padding exercised).
    out = position_wise_feed_forward(x, w1, b1, w2, b2)
    out = jax.block_until_ready(out)
    assert out.shape == (B, S, d_model)

    # Path 2: forced d_ff chunking (nk = 2) to exercise the reduction axis.
    out_chunked = position_wise_feed_forward(x, w1, b1, w2, b2, tff=128)
    out_chunked = jax.block_until_ready(out_chunked)

    # Reference 1: full f32 exact-GELU math (module semantics, dropout = identity).
    # Loose tolerance: kernel uses bf16 matmul operands + tanh GELU.
    ref_f32 = jax.nn.gelu(x @ w1 + b1, approximate=False) @ w2 + b2
    assert jnp.allclose(out, ref_f32, atol=5e-2, rtol=5e-2)
    assert jnp.allclose(out_chunked, ref_f32, atol=5e-2, rtol=5e-2)

    # Reference 2: same bf16-operand / f32-accumulate / tanh-GELU recipe — tight tol.
    xb = x.reshape(B * S, d_model).astype(jnp.bfloat16)
    h = jnp.dot(xb, w1.astype(jnp.bfloat16), preferred_element_type=jnp.float32) + b1
    h = jax.nn.gelu(h, approximate=True)
    ref_bf16 = (jnp.dot(h.astype(jnp.bfloat16), w2.astype(jnp.bfloat16),
                        preferred_element_type=jnp.float32) + b2).reshape(B, S, d_model)
    assert jnp.allclose(out, ref_bf16, atol=2e-3, rtol=2e-3)
    assert jnp.allclose(out_chunked, ref_bf16, atol=2e-3, rtol=2e-3)

    print("KERNEL_OK")
</pallas_src>

<mosaic_0001>
module attributes {stable_mosaic.version = 11 : i64} {
  func.func @_ffn_kernel(%arg0: i32, %arg1: i32, %arg2: memref<16x32xf32, #tpu.memory_space<vmem>>, %arg3: memref<32x256xbf16, #tpu.memory_space<vmem>>, %arg4: memref<1x256xf32, #tpu.memory_space<vmem>>, %arg5: memref<256x32xbf16, #tpu.memory_space<vmem>>, %arg6: memref<1x32xf32, #tpu.memory_space<vmem>>, %arg7: memref<16x32xf32, #tpu.memory_space<vmem>>) attributes {dimension_semantics = [#tpu.dimension_semantics<parallel>, #tpu.dimension_semantics<arbitrary>], iteration_bounds = array<i64: 2, 1>, scalar_prefetch = 0 : i64, scratch_operands = 0 : i64, tpu.core_type = #tpu.core_type<tc>, window_params = [{transform_indices = @transform_0, window_bounds = array<i64: 16, 32>}, {transform_indices = @transform_1, window_bounds = array<i64: 32, 256>}, {transform_indices = @transform_2, window_bounds = array<i64: 1, 256>}, {transform_indices = @transform_3, window_bounds = array<i64: 256, 32>}, {pipeline_mode = #tpu.pipeline_mode<synchronous>, transform_indices = @transform_4, window_bounds = array<i64: 1, 32>}, {transform_indices = @transform_5, window_bounds = array<i64: 16, 32>}]} {
    %c0_i32 = arith.constant 0 : i32
    %0 = arith.cmpi eq, %arg1, %c0_i32 : i32
    %1 = arith.extui %0 : i1 to i32
    %c0_i32_0 = arith.constant 0 : i32
    %2 = arith.cmpi ne, %1, %c0_i32_0 : i32
    scf.if %2 {
      %cst_19 = arith.constant 0.000000e+00 : f32
      %32 = vector.broadcast %cst_19 : f32 to vector<16x32xf32>
      %c0_20 = arith.constant 0 : index
      %c0_21 = arith.constant 0 : index
      %33 = vector.load %arg7[%c0_20, %c0_21] : memref<16x32xf32, #tpu.memory_space<vmem>>, vector<16x32xf32>
      tpu.vector_store %arg7[%c0_20, %c0_21], %32 {strides = array<i32>} : memref<16x32xf32, #tpu.memory_space<vmem>>, vector<16x32xf32>,
    } else {
    }
    %c0 = arith.constant 0 : index
    %c0_1 = arith.constant 0 : index
    %3 = vector.load %arg2[%c0, %c0_1] : memref<16x32xf32, #tpu.memory_space<vmem>>, vector<16x32xf32>
    %4 = arith.truncf %3 : vector<16x32xf32> to vector<16x32xbf16>
    %c0_2 = arith.constant 0 : index
    %c0_3 = arith.constant 0 : index
    %5 = vector.load %arg3[%c0_2, %c0_3] : memref<32x256xbf16, #tpu.memory_space<vmem>>, vector<32x256xbf16>
    %cst = arith.constant dense<0.000000e+00> : vector<16x256xf32>
    %6 = tpu.matmul %4, %5, %cst {dimension_numbers = #tpu.dot_dimension_numbers<[1], [0], [0], [1], [0, 0, 1, 1], [], []>} : vector<16x32xbf16>, vector<32x256xbf16>, vector<16x256xf32> -> vector<16x256xf32>
    %c0_4 = arith.constant 0 : index
    %c0_5 = arith.constant 0 : index
    %7 = vector.load %arg4[%c0_4, %c0_5] : memref<1x256xf32, #tpu.memory_space<vmem>>, vector<1x256xf32>
    %8 = vector.broadcast %7 : vector<1x256xf32> to vector<16x256xf32>
    %9 = arith.addf %6, %8 : vector<16x256xf32>
    %10 = arith.mulf %9, %9 : vector<16x256xf32>
    %11 = arith.mulf %9, %10 : vector<16x256xf32>
    %cst_6 = arith.constant 4.471500e-02 : f32
    %12 = vector.broadcast %cst_6 : f32 to vector<16x256xf32>
    %13 = arith.mulf %12, %11 : vector<16x256xf32>
    %14 = arith.addf %9, %13 : vector<16x256xf32>
    %cst_7 = arith.constant 0.797884583 : f32
    %15 = vector.broadcast %cst_7 : f32 to vector<16x256xf32>
    %16 = arith.mulf %15, %14 : vector<16x256xf32>
    %17 = math.tanh %16 : vector<16x256xf32>
    %cst_8 = arith.constant 1.000000e+00 : f32
    %18 = vector.broadcast %cst_8 : f32 to vector<16x256xf32>
    %19 = arith.addf %18, %17 : vector<16x256xf32>
    %cst_9 = arith.constant 5.000000e-01 : f32
    %20 = vector.broadcast %cst_9 : f32 to vector<16x256xf32>
    %21 = arith.mulf %20, %19 : vector<16x256xf32>
    %22 = arith.mulf %9, %21 : vector<16x256xf32>
    %c0_10 = arith.constant 0 : index
    %c0_11 = arith.constant 0 : index
    %23 = vector.load %arg7[%c0_10, %c0_11] : memref<16x32xf32, #tpu.memory_space<vmem>>, vector<16x32xf32>
    %24 = arith.truncf %22 : vector<16x256xf32> to vector<16x256xbf16>
    %c0_12 = arith.constant 0 : index
    %c0_13 = arith.constant 0 : index
    %25 = vector.load %arg5[%c0_12, %c0_13] : memref<256x32xbf16, #tpu.memory_space<vmem>>, vector<256x32xbf16>
    %cst_14 = arith.constant dense<0.000000e+00> : vector<16x32xf32>
    %26 = tpu.matmul %24, %25, %cst_14 {dimension_numbers = #tpu.dot_dimension_numbers<[1], [0], [0], [1], [0, 0, 1, 1], [], []>} : vector<16x256xbf16>, vector<256x32xbf16>, vector<16x32xf32> -> vector<16x32xf32>
    %27 = arith.addf %23, %26 : vector<16x32xf32>
    %c0_15 = arith.constant 0 : index
    %c0_16 = arith.constant 0 : index
    %28 = vector.load %arg7[%c0_15, %c0_16] : memref<16x32xf32, #tpu.memory_space<vmem>>, vector<16x32xf32>
    tpu.vector_store %arg7[%c0_15, %c0_16], %27 {strides = array<i32>} : memref<16x32xf32, #tpu.memory_space<vmem>>, vector<16x32xf32>,
    %c0_i32_17 = arith.constant 0 : i32
    %29 = arith.cmpi eq, %arg1, %c0_i32_17 : i32
    %30 = arith.extui %29 : i1 to i32
    %c0_i32_18 = arith.constant 0 : i32
    %31 = arith.cmpi ne, %30, %c0_i32_18 : i32
    scf.if %31 {
      %c0_19 = arith.constant 0 : index
      %c0_20 = arith.constant 0 : index
      %32 = vector.load %arg7[%c0_19, %c0_20] : memref<16x32xf32, #tpu.memory_space<vmem>>, vector<16x32xf32>
      %c0_21 = arith.constant 0 : index
      %c0_22 = arith.constant 0 : index
      %33 = vector.load %arg6[%c0_21, %c0_22] : memref<1x32xf32, #tpu.memory_space<vmem>>, vector<1x32xf32>
      %34 = vector.broadcast %33 : vector<1x32xf32> to vector<16x32xf32>
      %35 = arith.addf %32, %34 : vector<16x32xf32>
      %c0_23 = arith.constant 0 : index
      %c0_24 = arith.constant 0 : index
      %36 = vector.load %arg7[%c0_23, %c0_24] : memref<16x32xf32, #tpu.memory_space<vmem>>, vector<16x32xf32>
      tpu.vector_store %arg7[%c0_23, %c0_24], %35 {strides = array<i32>} : memref<16x32xf32, #tpu.memory_space<vmem>>, vector<16x32xf32>,
    } else {
    }
    return
  }
  func.func @transform_0(%arg0: i32, %arg1: i32) -> (i32, i32) {
    %c0_i32 = arith.constant 0 : i32
    %c0_i32_0 = arith.constant 0 : i32
    return %arg0, %c0_i32 : i32, i32
  }
  func.func @transform_1(%arg0: i32, %arg1: i32) -> (i32, i32) {
    %c0_i32 = arith.constant 0 : i32
    %c0_i32_0 = arith.constant 0 : i32
    return %c0_i32, %arg1 : i32, i32
  }
  func.func @transform_2(%arg0: i32, %arg1: i32) -> (i32, i32) {
    %c0_i32 = arith.constant 0 : i32
    %c0_i32_0 = arith.constant 0 : i32
    return %c0_i32, %arg1 : i32, i32
  }
  func.func @transform_3(%arg0: i32, %arg1: i32) -> (i32, i32) {
    %c0_i32 = arith.constant 0 : i32
    %c0_i32_0 = arith.constant 0 : i32
    return %arg1, %c0_i32 : i32, i32
  }
  func.func @transform_4(%arg0: i32, %arg1: i32) -> (i32, i32) {
    %c0_i32 = arith.constant 0 : i32
    %c0_i32_0 = arith.constant 0 : i32
    %c0_i32_1 = arith.constant 0 : i32
    return %c0_i32, %c0_i32_0 : i32, i32
  }
  func.func @transform_5(%arg0: i32, %arg1: i32) -> (i32, i32) {
    %c0_i32 = arith.constant 0 : i32
    %c0_i32_0 = arith.constant 0 : i32
    return %arg0, %c0_i32 : i32, i32
  }
}

</mosaic_0001>

<llo_original>
// kernel: tpu_custom_call.1
$region0: #{tpu_custom_call.1}
  #allocation0 [shape = 'u32[]', space=smem, size = 0x4, offset = 0x4, fixed_abs, tag = 'smem constant byte address 0x4 - core index']
  #allocation1 [shape = 'u32[72,128]{1,0:T(1,128)}', space=vmem, size = 0x9000, scoped, tag = 'internal scratch']
  %s0 = inlined_call_operand.vmem [shape: f32[32,32], index: 0, kind: input, shape index: {}]
  %s1 = inlined_call_operand.vmem [shape: bf16[32,256], index: 1, kind: input, shape index: {}]
  %s2 = inlined_call_operand.vmem [shape: f32[1,256], index: 2, kind: input, shape index: {}]
  %s3 = inlined_call_operand.vmem [shape: bf16[256,32], index: 3, kind: input, shape index: {}]
  %s4 = inlined_call_operand.vmem [shape: f32[1,32], index: 4, kind: input, shape index: {}]
  %s5 = inlined_call_operand.hbm [shape: f32[32,32], index: 5, kind: output, shape index: {}]
  %s6 = sld [smem:[#allocation0]]
  $region61: #{tpu_custom_call.1} parent=0
    _
  %s8 = ssub.s32 1, %s6
  %s9 = scalar_select 0, %s8, %s6
  $region1: #{tpu_custom_call.1} parent=0
    #allocation2 [shape = 'u8[16384]{0}', space=vmem, size = 0x4000, scoped, tag = 'output window, operand 0']
    #allocation3 [shape = 's32[2]{0}', space=sflag, size = 0x8, scoped, tag = 'scoped memory for tpu_custom_call.1']
    %10 = vsyncpa [#allocation3], 0
    %s11 = scalar_lea.sflag [#allocation3], 1
    %12 = vsyncpa %s11, 0
    loop: start=0, step=1, limit=4
    $region2: #{tpu_custom_call.1} parent=1 // loop_pre_header
      _
    $region3: #{tpu_custom_call.1} parent=1 // loop_header
      %s14 = sphi 0, %s18
      %p15 = scmp.ge.s32.totalorder %s14, 4
      %s21 = sphi 0, %s33
      %s22 = sphi 0, %s29
      %s23 = sphi 0, %s21
      %s24 = sphi 0, %s22
      %s25 = sphi 0, %s23
      %s26 = sphi 0, %s24
      %s36 = sphi 0, %s38
      %s39 = sphi 0, %s36
      %s40 = sphi 0, %s39
      %s56 = sphi 0, %s40
      %s62 = sphi 0, %s64
      %s65 = sphi 0, %s62
      %s66 = sphi 0, %s65
      %s82 = sphi 0, %s66
      %s88 = sphi 0, %s90
      %s91 = sphi 0, %s88
      %s92 = sphi 0, %s91
      %s108 = sphi 0, %s92
      %s114 = sphi 0, %s116
      %s117 = sphi 0, %s114
      %s118 = sphi 0, %s117
      %s134 = sphi 0, %s118
      %s138 = sphi 0, %s138
      %s140 = sphi 0, %s138
      %s141 = sphi 0, %s140
      %s155 = sphi 0, %s141
      %s161 = sphi 0, %s163
      %s164 = sphi 0, %s161
      %s165 = sphi 0, %s164
      %s181 = sphi 0, %s165
    $region4: #{tpu_custom_call.1} parent=1 // loop_header_branch
      %17 = sbr.rel (%p15) target = $region8
    $region5: #{tpu_custom_call.1} parent=1 // loop_body
      %s19 = ssub.s32 %s14, 1
      %s20 = ssub.s32 %s14, 2
      %s27 = sadd.s32 1, %s22
      %p28 = scmp.ge.s32.totalorder %s27, 1
      %s29 = scalar_select %p28, 0, %s27
      %s30 = sadd.s32 1, %s21
      %s31 = scalar_select %p28, %s30, %s21
      %p32 = scmp.ge.s32.totalorder %s31, 2
      %s33 = scalar_select %p32, 0, %s31
      %s34 = ssub.s32 %s21, %s33
      %p35 = scmp.eq.s32.totalorder %s34, 0
      %s37 = sadd.s32 %s36, 1
      %s38 = scalar_select %p35, %s36, %s37
      %p41 = pneg %p35
      %p42 = scmp.eq.s32.totalorder %s14, 1
      %p43 = por %p41, %p42
      %p44 = scmp.ne.s32.totalorder %s36, %s39
      %p45 = scmp.eq.s32.totalorder %s14, 0
      %p46 = por %p44, %p45
      %p47 = scmp.ne.s32.totalorder %s36, %s39
      %p48 = scmp.eq.s32.totalorder %s19, 1
      %p49 = por %p47, %p48
      %p50 = scmp.ne.s32.totalorder %s39, %s40
      %p51 = scmp.eq.s32.totalorder %s19, 0
      %p52 = por %p50, %p51
      %p53 = scmp.ne.s32.totalorder %s39, %s40
      %p54 = scmp.eq.s32.totalorder %s20, 1
      %p55 = por %p53, %p54
      %p57 = scmp.ne.s32.totalorder %s40, %s56
      %p58 = scmp.eq.s32.totalorder %s20, 0
      %p59 = por %p57, %p58
      %s60 = ssub.s32 %s22, %s29
      %p61 = scmp.eq.s32.totalorder %s60, 0
      %s63 = sadd.s32 %s62, 1
      %s64 = scalar_select %p61, %s62, %s63
      %p67 = pneg %p61
      %p68 = scmp.eq.s32.totalorder %s14, 1
      %p69 = por %p67, %p68
      %p70 = scmp.ne.s32.totalorder %s62, %s65
      %p71 = scmp.eq.s32.totalorder %s14, 0
      %p72 = por %p70, %p71
      %p73 = scmp.ne.s32.totalorder %s62, %s65
      %p74 = scmp.eq.s32.totalorder %s19, 1
      %p75 = por %p73, %p74
      %p76 = scmp.ne.s32.totalorder %s65, %s66
      %p77 = scmp.eq.s32.totalorder %s19, 0
      %p78 = por %p76, %p77
      %p79 = scmp.ne.s32.totalorder %s65, %s66
      %p80 = scmp.eq.s32.totalorder %s20, 1
      %p81 = por %p79, %p80
      %p83 = scmp.ne.s32.totalorder %s66, %s82
      %p84 = scmp.eq.s32.totalorder %s20, 0
      %p85 = por %p83, %p84
      %s86 = ssub.s32 %s22, %s29
      %p87 = scmp.eq.s32.totalorder %s86, 0
      %s89 = sadd.s32 %s88, 1
      %s90 = scalar_select %p87, %s88, %s89
      %p93 = pneg %p87
      %p94 = scmp.eq.s32.totalorder %s14, 1
      %p95 = por %p93, %p94
      %p96 = scmp.ne.s32.totalorder %s88, %s91
      %p97 = scmp.eq.s32.totalorder %s14, 0
      %p98 = por %p96, %p97
      %p99 = scmp.ne.s32.totalorder %s88, %s91
      %p100 = scmp.eq.s32.totalorder %s19, 1
      %p101 = por %p99, %p100
      %p102 = scmp.ne.s32.totalorder %s91, %s92
      %p103 = scmp.eq.s32.totalorder %s19, 0
      %p104 = por %p102, %p103
      %p105 = scmp.ne.s32.totalorder %s91, %s92
      %p106 = scmp.eq.s32.totalorder %s20, 1
      %p107 = por %p105, %p106
      %p109 = scmp.ne.s32.totalorder %s92, %s108
      %p110 = scmp.eq.s32.totalorder %s20, 0
      %p111 = por %p109, %p110
      %s112 = ssub.s32 %s22, %s29
      %p113 = scmp.eq.s32.totalorder %s112, 0
      %s115 = sadd.s32 %s114, 1
      %s116 = scalar_select %p113, %s114, %s115
      %p119 = pneg %p113
      %p120 = scmp.eq.s32.totalorder %s14, 1
      %p121 = por %p119, %p120
      %p122 = scmp.ne.s32.totalorder %s114, %s117
      %p123 = scmp.eq.s32.totalorder %s14, 0
      %p124 = por %p122, %p123
      %p125 = scmp.ne.s32.totalorder %s114, %s117
      %p126 = scmp.eq.s32.totalorder %s19, 1
      %p127 = por %p125, %p126
      %p128 = scmp.ne.s32.totalorder %s117, %s118
      %p129 = scmp.eq.s32.totalorder %s19, 0
      %p130 = por %p128, %p129
      %p131 = scmp.ne.s32.totalorder %s117, %s118
      %p132 = scmp.eq.s32.totalorder %s20, 1
      %p133 = por %p131, %p132
      %p135 = scmp.ne.s32.totalorder %s118, %s134
      %p136 = scmp.eq.s32.totalorder %s20, 0
      %p137 = por %p135, %p136
      %s139 = sadd.s32 %s138, 1
      %p142 = scmp.eq.s32.totalorder %s14, 1
      %p143 = scmp.ne.s32.totalorder %s138, %s140
      %p144 = scmp.eq.s32.totalorder %s14, 0
      %p145 = por %p143, %p144
      %p146 = scmp.ne.s32.totalorder %s138, %s140
      %p147 = scmp.eq.s32.totalorder %s19, 1
      %p148 = por %p146, %p147
      %p149 = scmp.ne.s32.totalorder %s140, %s141
      %p150 = scmp.eq.s32.totalorder %s19, 0
      %p151 = por %p149, %p150
      %p152 = scmp.ne.s32.totalorder %s140, %s141
      %p153 = scmp.eq.s32.totalorder %s20, 1
      %p154 = por %p152, %p153
      %p156 = scmp.ne.s32.totalorder %s141, %s155
      %p157 = scmp.eq.s32.totalorder %s20, 0
      %p158 = por %p156, %p157
      %s159 = ssub.s32 %s21, %s33
      %p160 = scmp.eq.s32.totalorder %s159, 0
      %s162 = sadd.s32 %s161, 1
      %s163 = scalar_select %p160, %s161, %s162
      %p166 = pneg %p160
      %p167 = scmp.eq.s32.totalorder %s14, 1
      %p168 = por %p166, %p167
      %p169 = scmp.ne.s32.totalorder %s161, %s164
      %p170 = scmp.eq.s32.totalorder %s14, 0
      %p171 = por %p169, %p170
      %p172 = scmp.ne.s32.totalorder %s161, %s164
      %p173 = scmp.eq.s32.totalorder %s19, 1
      %p174 = por %p172, %p173
      %p175 = scmp.ne.s32.totalorder %s164, %s165
      %p176 = scmp.eq.s32.totalorder %s19, 0
      %p177 = por %p175, %p176
      %p178 = scmp.ne.s32.totalorder %s164, %s165
      %p179 = scmp.eq.s32.totalorder %s20, 1
      %p180 = por %p178, %p179
      %p182 = scmp.ne.s32.totalorder %s165, %s181
      %p183 = scmp.eq.s32.totalorder %s20, 0
      %p184 = por %p182, %p183
      %p185 = scmp.le.s32.totalorder 1, %s14
      %p186 = scmp.lt.s32.totalorder %s14, 3
      %p187 = pnand %p185, %p186
      %p188 = pneg %p187
      // Predicated region
      $region9: #{tpu_custom_call.1} parent=5 // pred_check
        _
      $region10: #{tpu_custom_call.1} parent=5 // pred_check_branch
        %190 = sbr.rel (%p187) target = $region12
      $region11: #{tpu_custom_call.1} parent=5 // pred_region
        %s191 = ssub.s32 %s14, 1
        // Predicated region
        $region13: #{tpu_custom_call.1} parent=11 // pred_check
          %p192 = pneg %p78
        $region14: #{tpu_custom_call.1} parent=11 // pred_check_branch
          %194 = sbr.rel (%p192) target = $region16
        $region15: #{tpu_custom_call.1} parent=11 // pred_region
          %s195 = smul.u32 2, %s24
          %p196 = scmp.lt.s32.totalorder %s195, 1
          %s197 = scalar_select %p196, %s195, 1
          %s198 = smul.addr %s197, 4
          %s199 = scalar_lea.vmem %s1, %s198
          %s200 = smul.u32 2, %s24
        $region16: #{tpu_custom_call.1} parent=11 // pred_fallthru
          _
        // Predicated region
        $region17: #{tpu_custom_call.1} parent=11 // pred_check
          %p201 = pneg %p104
        $region18: #{tpu_custom_call.1} parent=11 // pred_check_branch
          %203 = sbr.rel (%p201) target = $region20
        $region19: #{tpu_custom_call.1} parent=11 // pred_region
          %s204 = smul.u32 2, %s24
          %p205 = scmp.lt.s32.totalorder %s204, 1
          %s206 = scalar_select %p205, %s204, 1
          %s207 = scalar_lea.vmem %s2, %s206
          %s208 = smul.u32 2, %s24
        $region20: #{tpu_custom_call.1} parent=11 // pred_fallthru
          _
        // Predicated region
        $region21: #{tpu_custom_call.1} parent=11 // pred_check
          %p209 = pneg %p130
        $region22: #{tpu_custom_call.1} parent=11 // pred_check_branch
          %211 = sbr.rel (%p209) target = $region24
        $region23: #{tpu_custom_call.1} parent=11 // pred_region
          %s212 = smul.u32 32, %s24
          %p213 = scmp.lt.s32.totalorder %s212, 31
          %s214 = scalar_select %p213, %s212, 31
          %s215 = smul.addr %s214, 4
          %s216 = scalar_lea.vmem %s3, %s215
          %s217 = smul.u32 32, %s24
        $region24: #{tpu_custom_call.1} parent=11 // pred_fallthru
          _
        // Predicated region
        $region25: #{tpu_custom_call.1} parent=11 // pred_check
          %p218 = pneg %p151
        $region26: #{tpu_custom_call.1} parent=11 // pred_check_branch
          %220 = sbr.rel (%p218) target = $region28
        $region27: #{tpu_custom_call.1} parent=11 // pred_region
          _
        $region28: #{tpu_custom_call.1} parent=11 // pred_fallthru
          _
      $region12: #{tpu_custom_call.1} parent=5 // pred_fallthru
        _
      %p221 = scmp.lt.s32.totalorder %s14, 2
      // Predicated region
      $region29: #{tpu_custom_call.1} parent=5 // pred_check
        %p222 = pneg %p221
      $region30: #{tpu_custom_call.1} parent=5 // pred_check_branch
        %224 = sbr.rel (%p222) target = $region32
      $region31: #{tpu_custom_call.1} parent=5 // pred_region
        // Predicated region
        $region33: #{tpu_custom_call.1} parent=31 // pred_check
          %p225 = pneg %p46
        $region34: #{tpu_custom_call.1} parent=31 // pred_check_branch
          %227 = sbr.rel (%p225) target = $region36
        $region35: #{tpu_custom_call.1} parent=31 // pred_region
          %s228 = smul.u32 2, %s21
          %p229 = scmp.lt.s32.totalorder %s228, 3
          %s230 = scalar_select %p229, %s228, 3
          %s231 = smul.addr %s230, 8
          %s232 = scalar_lea.vmem %s0, %s231
          %s233 = smul.u32 2, %s21
        $region36: #{tpu_custom_call.1} parent=31 // pred_fallthru
          _
      $region32: #{tpu_custom_call.1} parent=5 // pred_fallthru
        _
      %p234 = scmp.le.s32.totalorder 1, %s14
      %p235 = scmp.lt.s32.totalorder %s14, 3
      %p236 = pnand %p234, %p235
      %p237 = pneg %p236
      // Predicated region
      $region37: #{tpu_custom_call.1} parent=5 // pred_check
        _
      $region38: #{tpu_custom_call.1} parent=5 // pred_check_branch
        %239 = sbr.rel (%p236) target = $region40
      $region39: #{tpu_custom_call.1} parent=5 // pred_region
        %s240 = ssub.s32 %s14, 1
        %s241 = smul.u32 2, %s23
        %p242 = scmp.lt.s32.totalorder %s241, 3
        %s243 = scalar_select %p242, %s241, 3
        %s244 = smul.addr %s243, 8
        %s245 = scalar_lea.vmem %s0, %s244
        %p246 = pneg %p52
        %p247 = pneg %p49
        %s248 = smul.u32 2, %s24
        %p249 = scmp.lt.s32.totalorder %s248, 1
        %s250 = scalar_select %p249, %s248, 1
        %s251 = smul.addr %s250, 4
        %s252 = scalar_lea.vmem %s1, %s251
        %p253 = pneg %p78
        %p254 = pneg %p75
        %s255 = smul.u32 2, %s24
        %p256 = scmp.lt.s32.totalorder %s255, 1
        %s257 = scalar_select %p256, %s255, 1
        %s258 = scalar_lea.vmem %s2, %s257
        %p259 = pneg %p104
        %p260 = pneg %p101
        %s261 = smul.u32 32, %s24
        %p262 = scmp.lt.s32.totalorder %s261, 31
        %s263 = scalar_select %p262, %s261, 31
        %s264 = smul.addr %s263, 4
        %s265 = scalar_lea.vmem %s3, %s264
        %p266 = pneg %p130
        %p267 = pneg %p127
        %p268 = pneg %p151
        %p269 = pneg %p148
        %p270 = pneg %p177
        %p271 = pneg %p174
        %s272 = sand.u32 %s164, 1
        %s273 = scalar_lea.sflag [#allocation3], %s272
        %s274 = sand.u32 %s164, 1
        %s275 = smul.addr %s274, 16
        %s276 = scalar_lea.vmem [#allocation2], %s275
        %s277 = smul.u32 2, %s23
        %p278 = scmp.lt.s32.totalorder %s277, 3
        %s279 = scalar_select %p278, %s277, 3
        %s280 = smul.addr %s279, 8
        %s281 = scalar_lea.vmem %s0, %s280
        %s282 = smul.u32 2, %s23
        %s283 = smul.u32 2, %s24
        %p284 = scmp.lt.s32.totalorder %s283, 1
        %s285 = scalar_select %p284, %s283, 1
        %s286 = smul.addr %s285, 4
        %s287 = scalar_lea.vmem %s1, %s286
        %s288 = smul.u32 2, %s24
        %s289 = smul.u32 2, %s24
        %p290 = scmp.lt.s32.totalorder %s289, 1
        %s291 = scalar_select %p290, %s289, 1
        %s292 = scalar_lea.vmem %s2, %s291
        %s293 = smul.u32 2, %s24
        %s294 = smul.u32 32, %s24
        %p295 = scmp.lt.s32.totalorder %s294, 31
        %s296 = scalar_select %p295, %s294, 31
        %s297 = smul.addr %s296, 4
        %s298 = scalar_lea.vmem %s3, %s297
        %s299 = smul.u32 32, %s24
        %s300 = smul.u32 2, %s23
        %p302 = scmp.eq.s32.totalorder %s24, 0
        // Predicated region
        $region41: #{tpu_custom_call.1} parent=39 // pred_check
          %p303 = pneg %p302
        $region42: #{tpu_custom_call.1} parent=39 // pred_check_branch
          %305 = sbr.rel (%p303) target = $region44
        $region43: #{tpu_custom_call.1} parent=39 // pred_region
          %vm306 = vcmask 261120
          %307 = vst.msk [vmem:[%s276] sm:$0xff] %vm306, 0.0
          %308 = vst.msk [vmem:[%s276 + $0x8] sm:$0xff] %vm306, 0.0
        $region44: #{tpu_custom_call.1} parent=39 // pred_fallthru
          _
        %v309 = vld [vmem:[%s281] sm:$0xff]
        %v310 = vld [vmem:[%s281 + $0x8] sm:$0xff]
        %v311 = vpack.c.bf16 %v310, %v309
        %v312 = vld [vmem:[%s287] sm:$0xff]
        %v313 = vld [vmem:[%s287 + $0x8] sm:$0xff]
        %v314 = vld [vmem:[%s287 + $0x10] sm:$0xff]
        %v315 = vld [vmem:[%s287 + $0x18] sm:$0xff]
        %v316 = vld [vmem:[%s292] sm:$0x3]
        %v318 = vperm.slane %v316, 0
        %v319 = vperm.slane %v316, 1
        %v326 = vunpack.c.l.b16 %v312
        %v327 = vunpack.c.h.b16 %v312
        %v328 = vunpack.c.l.b16 %v313
        %v329 = vunpack.c.h.b16 %v313
        %v330 = vunpack.c.l.b16 %v314
        %v331 = vunpack.c.h.b16 %v314
        %v332 = vunpack.c.l.b16 %v315
        %v333 = vunpack.c.h.b16 %v315
        %v334 = vpack.c.b16 %v328, %v326
        %v335 = vpack.c.b16 %v329, %v327
        %v336 = vpack.c.b16 %v332, %v330
        %v337 = vpack.c.b16 %v333, %v331
        %vm342 = vcmask 261120
        %v344 = vsel %vm342, %v311, 0
        %346 = vmatpush.bf16.msra.mxu0 0
        %347 = vmatpush.bf16.msra.mxu0 0
        %348 = vmatpush.bf16.msra.mxu0 0
        %349 = vmatpush.bf16.msra.mxu0 0
        %350 = vmatpush.bf16.msra.mxu0 0
        %351 = vmatpush.bf16.msra.mxu0 0
        %352 = vmatpush.bf16.msra.mxu0 %v336
        %353 = vmatpush.bf16.msra.mxu0 %v334
        %354 = vmatmul.bf16.gmra.mxu0 %v344
        %v355 = vpop.f32.mrf.mxu0
        %v356 = vadd.f32 %v318, %v355
        %v357 = vpop.f32.mrf.mxu0
        %v358 = vadd.f32 %v318, %v357
        %359 = vdwg.mxu0
        %360 = vmatpush.bf16.msra.mxu0 0
        %361 = vmatpush.bf16.msra.mxu0 0
        %362 = vmatpush.bf16.msra.mxu0 0
        %363 = vmatpush.bf16.msra.mxu0 0
        %364 = vmatpush.bf16.msra.mxu0 0
        %365 = vmatpush.bf16.msra.mxu0 0
        %366 = vmatpush.bf16.msra.mxu0 %v337
        %367 = vmatpush.bf16.msra.mxu0 %v335
        %368 = vmatmul.bf16.gmra.mxu0 %v344
        %v369 = vpop.f32.mrf.mxu0
        %v370 = vadd.f32 %v319, %v369
        %v371 = vpop.f32.mrf.mxu0
        %v372 = vadd.f32 %v319, %v371
        %373 = vdwg.mxu0
        %v374 = vmul.f32 %v356, %v356
        %v375 = vmul.f32 %v370, %v370
        %v376 = vmul.f32 %v358, %v358
        %v377 = vmul.f32 %v372, %v372
        %v378 = vmul.f32 %v356, %v374
        %v379 = vmul.f32 %v370, %v375
        %v380 = vmul.f32 %v358, %v376
        %v381 = vmul.f32 %v372, %v377
        %v382 = vmul.f32 %v378, 0.044715
        %v383 = vmul.f32 %v379, 0.044715
        %v384 = vmul.f32 %v380, 0.044715
        %v385 = vmul.f32 %v381, 0.044715
        %v386 = vadd.f32 %v356, %v382
        %v387 = vadd.f32 %v370, %v383
        %v388 = vadd.f32 %v358, %v384
        %v389 = vadd.f32 %v372, %v385
        %v390 = vmul.f32 %v386, 0.7978846
        %v391 = vmul.f32 %v387, 0.7978846
        %v392 = vmul.f32 %v388, 0.7978846
        %v393 = vmul.f32 %v389, 0.7978846
        %v394 = vtanh.pop %v390
        %v395 = vtanh.pop %v391
        %v396 = vtanh.pop %v392
        %v397 = vtanh.pop %v393
        %v398 = vadd.f32 %v394, 1.0
        %v399 = vadd.f32 %v395, 1.0
        %v400 = vadd.f32 %v396, 1.0
        %v401 = vadd.f32 %v397, 1.0
        %v402 = vmul.f32 %v398, 0.5
        %v403 = vmul.f32 %v399, 0.5
        %v404 = vmul.f32 %v400, 0.5
        %v405 = vmul.f32 %v401, 0.5
        %v406 = vmul.f32 %v356, %v402
        %v407 = vmul.f32 %v370, %v403
        %v408 = vmul.f32 %v358, %v404
        %v409 = vmul.f32 %v372, %v405
        %v410 = vld [vmem:[%s276] sm:$0xff]
        %v411 = vld [vmem:[%s276 + $0x8] sm:$0xff]
        %v412 = vpack.c.bf16 %v408, %v406
        %v413 = vpack.c.bf16 %v409, %v407
        %v414 = vld [vmem:[%s298] sm:$0xf]
        %v415 = vld [vmem:[%s298 + $0x4] sm:$0xf]
        %v416 = vld [vmem:[%s298 + $0x8] sm:$0xf]
        %v417 = vld [vmem:[%s298 + $0xc] sm:$0xf]
        %v418 = vld [vmem:[%s298 + $0x10] sm:$0xf]
        %v419 = vld [vmem:[%s298 + $0x14] sm:$0xf]
        %v420 = vld [vmem:[%s298 + $0x18] sm:$0xf]
        %v421 = vld [vmem:[%s298 + $0x1c] sm:$0xf]
        %v422 = vld [vmem:[%s298 + $0x20] sm:$0xf]
        %v423 = vld [vmem:[%s298 + $0x24] sm:$0xf]
        %v424 = vld [vmem:[%s298 + $0x28] sm:$0xf]
        %v425 = vld [vmem:[%s298 + $0x2c] sm:$0xf]
        %v426 = vld [vmem:[%s298 + $0x30] sm:$0xf]
        %v427 = vld [vmem:[%s298 + $0x34] sm:$0xf]
        %v428 = vld [vmem:[%s298 + $0x38] sm:$0xf]
        %v429 = vld [vmem:[%s298 + $0x3c] sm:$0xf]
        %v430 = vld [vmem:[%s298 + $0x40] sm:$0xf]
        %v431 = vld [vmem:[%s298 + $0x44] sm:$0xf]
        %v432 = vld [vmem:[%s298 + $0x48] sm:$0xf]
        %v433 = vld [vmem:[%s298 + $0x4c] sm:$0xf]
        %v434 = vld [vmem:[%s298 + $0x50] sm:$0xf]
        %v435 = vld [vmem:[%s298 + $0x54] sm:$0xf]
        %v436 = vld [vmem:[%s298 + $0x58] sm:$0xf]
        %v437 = vld [vmem:[%s298 + $0x5c] sm:$0xf]
        %v438 = vld [vmem:[%s298 + $0x60] sm:$0xf]
        %v439 = vld [vmem:[%s298 + $0x64] sm:$0xf]
        %v440 = vld [vmem:[%s298 + $0x68] sm:$0xf]
        %v441 = vld [vmem:[%s298 + $0x6c] sm:$0xf]
        %v442 = vld [vmem:[%s298 + $0x70] sm:$0xf]
        %v443 = vld [vmem:[%s298 + $0x74] sm:$0xf]
        %v444 = vld [vmem:[%s298 + $0x78] sm:$0xf]
        %v445 = vld [vmem:[%s298 + $0x7c] sm:$0xf]
        %v478 = vunpack.c.l.b16 %v414
        %v479 = vunpack.c.l.b16 %v415
        %v480 = vunpack.c.l.b16 %v416
        %v481 = vunpack.c.l.b16 %v417
        %v482 = vunpack.c.l.b16 %v418
        %v483 = vunpack.c.l.b16 %v419
        %v484 = vunpack.c.l.b16 %v420
        %v485 = vunpack.c.l.b16 %v421
        %v486 = vunpack.c.l.b16 %v422
        %v487 = vunpack.c.l.b16 %v423
        %v488 = vunpack.c.l.b16 %v424
        %v489 = vunpack.c.l.b16 %v425
        %v490 = vunpack.c.l.b16 %v426
        %v491 = vunpack.c.l.b16 %v427
        %v492 = vunpack.c.l.b16 %v428
        %v493 = vunpack.c.l.b16 %v429
        %v494 = vunpack.c.l.b16 %v430
        %v495 = vunpack.c.l.b16 %v431
        %v496 = vunpack.c.l.b16 %v432
        %v497 = vunpack.c.l.b16 %v433
        %v498 = vunpack.c.l.b16 %v434
        %v499 = vunpack.c.l.b16 %v435
        %v500 = vunpack.c.l.b16 %v436
        %v501 = vunpack.c.l.b16 %v437
        %v502 = vunpack.c.l.b16 %v438
        %v503 = vunpack.c.l.b16 %v439
        %v504 = vunpack.c.l.b16 %v440
        %v505 = vunpack.c.l.b16 %v441
        %v506 = vunpack.c.l.b16 %v442
        %v507 = vunpack.c.l.b16 %v443
        %v508 = vunpack.c.l.b16 %v444
        %v509 = vunpack.c.l.b16 %v445
        %v510 = vpack.c.b16 %v479, %v478
        %v511 = vpack.c.b16 %v481, %v480
        %v512 = vpack.c.b16 %v483, %v482
        %v513 = vpack.c.b16 %v485, %v484
        %v514 = vpack.c.b16 %v487, %v486
        %v515 = vpack.c.b16 %v489, %v488
        %v516 = vpack.c.b16 %v491, %v490
        %v517 = vpack.c.b16 %v493, %v492
        %v518 = vpack.c.b16 %v495, %v494
        %v519 = vpack.c.b16 %v497, %v496
        %v520 = vpack.c.b16 %v499, %v498
        %v521 = vpack.c.b16 %v501, %v500
        %v522 = vpack.c.b16 %v503, %v502
        %v523 = vpack.c.b16 %v505, %v504
        %v524 = vpack.c.b16 %v507, %v506
        %v525 = vpack.c.b16 %v509, %v508
        %542 = vmatpush.bf16.msra.mxu0 %v517
        %543 = vmatpush.bf16.msra.mxu0 %v516
        %544 = vmatpush.bf16.msra.mxu0 %v515
        %545 = vmatpush.bf16.msra.mxu0 %v514
        %546 = vmatpush.bf16.msra.mxu0 %v513
        %547 = vmatpush.bf16.msra.mxu0 %v512
        %548 = vmatpush.bf16.msra.mxu0 %v511
        %549 = vmatpush.bf16.msra.mxu0 %v510
        %550 = vmatmul.bf16.gmra.mxu0 %v412
        %v551 = vpop.f32.mrf.mxu0
        %v552 = vadd.f32 0.0, %v551
        %v553 = vpop.f32.mrf.mxu0
        %v554 = vadd.f32 0.0, %v553
        %555 = vdwg.mxu0
        %556 = vmatpush.bf16.msra.mxu0 %v525
        %557 = vmatpush.bf16.msra.mxu0 %v524
        %558 = vmatpush.bf16.msra.mxu0 %v523
        %559 = vmatpush.bf16.msra.mxu0 %v522
        %560 = vmatpush.bf16.msra.mxu0 %v521
        %561 = vmatpush.bf16.msra.mxu0 %v520
        %562 = vmatpush.bf16.msra.mxu0 %v519
        %563 = vmatpush.bf16.msra.mxu0 %v518
        %564 = vmatmul.bf16.gmra.mxu0 %v413
        %v565 = vpop.f32.mrf.mxu0
        %v566 = vadd.f32 %v552, %v565
        %v567 = vpop.f32.mrf.mxu0
        %v568 = vadd.f32 %v554, %v567
        %569 = vdwg.mxu0
        %v570 = vadd.f32 %v410, %v566
        %v571 = vadd.f32 %v411, %v568
        %572 = vst.msk [vmem:[%s276] sm:$0xff] %vm342, %v570
        %573 = vst.msk [vmem:[%s276 + $0x8] sm:$0xff] %vm342, %v571
        // Predicated region
        $region45: #{tpu_custom_call.1} parent=39 // pred_check
          %p574 = pneg %p302
        $region46: #{tpu_custom_call.1} parent=39 // pred_check_branch
          %576 = sbr.rel (%p574) target = $region48
        $region47: #{tpu_custom_call.1} parent=39 // pred_region
          %v577 = vld [vmem:[%s276] sm:$0xff]
          %v578 = vld [vmem:[%s276 + $0x8] sm:$0xff]
          %v579 = vld [vmem:[%s4] sm:$0x1]
          %v581 = vperm.slane %v579, 0
          %v583 = vadd.f32 %v577, %v581
          %v584 = vadd.f32 %v578, %v581
          %585 = vst.msk [vmem:[%s276] sm:$0xff] %vm342, %v583
          %586 = vst.msk [vmem:[%s276 + $0x8] sm:$0xff] %vm342, %v584
        $region48: #{tpu_custom_call.1} parent=39 // pred_fallthru
          _
        %s587 = sand.u32 %s164, 1
        %s588 = scalar_lea.sflag [#allocation3], %s587
        %s589 = sand.u32 %s164, 1
        %s590 = smul.addr %s589, 16
        %s591 = scalar_lea.vmem [#allocation2], %s590
        // Predicated region
        $region49: #{tpu_custom_call.1} parent=39 // pred_check
          %p592 = pneg %p174
        $region50: #{tpu_custom_call.1} parent=39 // pred_check_branch
          %594 = sbr.rel (%p592) target = $region52
        $region51: #{tpu_custom_call.1} parent=39 // pred_region
          %s595 = smul.u32 2, %s23
          %597 = vsyncadd %s588, 0
          %s598 = smul.addr %s595, 8
          %s599 = scalar_lea.hbm %s5, %s598
          %s600 = sshll.u32 %s591, 4
          %s601 = int_to_ptr.vmem [resolvable:$true] %s600
          %s602 = sshll.u32 %s599, 4
          %s603 = int_to_ptr.hbm [resolvable:$true] %s602
          %608 = dma.vmem_to_hbm [thread:$0]  %s601, 256, %s603, %s588, 128, 128, 8
        $region52: #{tpu_custom_call.1} parent=39 // pred_fallthru
          _
      $region40: #{tpu_custom_call.1} parent=5 // pred_fallthru
        _
      %p609 = scmp.le.s32.totalorder 2, %s14
      // Predicated region
      $region53: #{tpu_custom_call.1} parent=5 // pred_check
        %p610 = pneg %p609
      $region54: #{tpu_custom_call.1} parent=5 // pred_check_branch
        %612 = sbr.rel (%p610) target = $region56
      $region55: #{tpu_custom_call.1} parent=5 // pred_region
        %s613 = ssub.s32 %s14, 2
        // Predicated region
        $region57: #{tpu_custom_call.1} parent=55 // pred_check
          %p614 = pneg %p180
        $region58: #{tpu_custom_call.1} parent=55 // pred_check_branch
          %616 = sbr.rel (%p614) target = $region60
        $region59: #{tpu_custom_call.1} parent=55 // pred_region
          %s617 = sand.u32 %s165, 1
          %s618 = scalar_lea.sflag [#allocation3], %s617
          %s619 = sand.u32 %s165, 1
          %s620 = smul.addr %s619, 16
          %s621 = scalar_lea.vmem [#allocation2], %s620
          %623 = dma.done %s618, 256
        $region60: #{tpu_custom_call.1} parent=55 // pred_fallthru
          _
      $region56: #{tpu_custom_call.1} parent=5 // pred_fallthru
        _
    $region6: #{tpu_custom_call.1} parent=1 // loop_footer
      %s18 = sadd.s32 1, %s14
    $region7: #{tpu_custom_call.1} parent=1 // loop_footer_branch
      %13 = sbr.rel target = $region3
    $region8: #{tpu_custom_call.1} parent=1 // loop_exit
      _
    %624 = vsyncpa [#allocation3], 1
    %s625 = scalar_lea.sflag [#allocation3], 1
    %626 = vsyncpa %s625, 1

</llo_original>
